<compile_context>
chip_gen: v7x
topology: tpu7x:2x2x1
jax: 0.10.0
libtpu: 0.0.40
codegen_flags: <defaults>
</compile_context>

<pallas_src>
import math

import jax
import jax.numpy as jnp
import numpy as np
from jax.experimental import pallas as pl
from jax.experimental.pallas import tpu as pltpu


# ----------------------------------------------------------------------------- kernel
def grad_ssq_kernel(y_ref, gt_ref, ssq_ref, acc_ref):
    """Accumulate grad = y @ G^T over K tiles; emit per-D-tile sum of squares."""
    k = pl.program_id(1)

    @pl.when(k == 0)
    def _init():
        acc_ref[...] = jnp.zeros_like(acc_ref)

    # (B, tk) bf16 x (tk, td) bf16 -> f32 accumulate; MXU-native (B,K)x(K,N) form.
    acc_ref[...] += jnp.dot(y_ref[...], gt_ref[...],
                            preferred_element_type=jnp.float32)

    @pl.when(k == pl.num_programs(1) - 1)
    def _epilogue():
        g = acc_ref[...]                                   # (B, td) f32, unscaled
        ssum = jnp.sum(g * g, axis=1, keepdims=True)       # (B, 1)
        # Lane-broadcast so the (1, B, 128) output block is a plain unmasked store.
        ssq_ref[...] = jnp.broadcast_to(ssum[None, :, :], ssq_ref.shape)


# ------------------------------------------------------------------------- tile planning
def _round_up(x, m):
    return -(-x // m) * m


def _vmem_capacity_bytes():
    """Physical VMEM per TensorCore; conservative (v7x) fallback if query fails."""
    try:
        cap = int(pltpu.get_tpu_info().vmem_capacity_bytes)
        if cap > 0:
            return cap
    except Exception:
        pass
    return 64 * 1024 * 1024


def _plan_tiles(batch, d, chw, *, nd_hint=2, tk_cap=None):
    """Pick (td, tk) from the chip's VMEM budget; pad D / CHW to tile multiples."""
    cap = _vmem_capacity_bytes()
    vmem_limit = int(cap * 0.80)        # scoped VMEM limit handed to Mosaic
    budget = int(cap * 0.60)            # tile working-set budget (headroom for internals)

    kp = _round_up(chw, 128)
    dp0 = _round_up(d, 128)

    # D tiles: shard the G stream across v7x's 2 TensorCores (harmless on 1-TC chips)
    # and keep a single G column-slice modest so tk can grow.
    nd = max(1, min(int(nd_hint), dp0 // 128))
    td = _round_up(-(-dp0 // nd), 128)
    dp = nd * td

    # Largest tk (multiple of 128) such that
    #   2*td*tk*2 (G dbl-buf bf16) + 2*batch*tk*2 (y dbl-buf bf16)
    #   + batch*td*4 (f32 acc) + 2*batch*128*4 (ssq out dbl-buf)  <=  budget.
    fixed = batch * td * 4 + 2 * batch * 128 * 4
    per_tk = 4 * td + 4 * batch
    tk = (budget - fixed) // per_tk
    tk = max(128, (tk // 128) * 128)
    tk = min(tk, kp)
    if tk_cap is not None:
        tk = min(tk, max(128, (int(tk_cap) // 128) * 128))

    kp = _round_up(kp, tk)              # K must be a whole number of tiles
    nk = kp // tk
    return td, tk, nd, nk, dp, kp, vmem_limit


# ------------------------------------------------------------------------------ wrapper
def path_length_penalty(w, x, gen_weight_t, steps, exp_sum_a, beta, key, *,
                        tk_cap=None, nd_hint=2):
    """Functional forward: returns (loss, new_exp_sum_a, new_steps, norm)."""
    B, n_latent, w_dim = w.shape
    _, C, H, W = x.shape
    image_size = H * W
    chw = C * H * W
    D = n_latent * w_dim
    assert gen_weight_t.shape == (chw, D)
    beta = float(beta)

    td, tk, nd, nk, dp, kp, vmem_limit = _plan_tiles(
        B, D, chw, nd_hint=nd_hint, tk_cap=tk_cap)

    # torch.randn(x.shape); streamed in bf16 (all accumulation stays f32).
    y = jax.random.normal(key, (B, chw), dtype=jnp.float32).astype(jnp.bfloat16)
    gt = gen_weight_t.astype(jnp.bfloat16)     # (CHW, D), lane-dense on D

    # Zero-pad to tile multiples (zeros contribute nothing).  In production the weight
    # would be stored pre-padded/pre-transposed once at init, not per call.
    if kp != chw or dp != D:
        y = jnp.pad(y, ((0, 0), (0, kp - chw)))
        gt = jnp.pad(gt, ((0, kp - chw), (0, dp - D)))

    ssq = pl.pallas_call(
        grad_ssq_kernel,
        out_shape=jax.ShapeDtypeStruct((nd, B, 128), jnp.float32),
        grid=(nd, nk),
        in_specs=[
            pl.BlockSpec((B, tk), lambda dt, kt: (0, kt)),      # y tile
            pl.BlockSpec((tk, td), lambda dt, kt: (kt, dt)),    # G tile (K x N, MXU-native)
        ],
        out_specs=pl.BlockSpec((1, B, 128), lambda dt, kt: (dt, 0, 0)),
        scratch_shapes=[pltpu.VMEM((B, td), jnp.float32)],       # grad accumulator
        compiler_params=pltpu.CompilerParams(
            dimension_semantics=("parallel", "arbitrary"),       # D parallel, K reduction
            vmem_limit_bytes=vmem_limit),
    )(y, gt)

    # O(B) scalar epilogue in the wrapper (runs exactly once, independent of core count).
    ssq_total = jnp.sum(ssq[:, :, 0], axis=0)                    # (B,)
    # norm[b] = sqrt( mean_i sum_j (grad[b,i,j]/sqrt(HW))^2 )
    norm = jnp.sqrt(ssq_total / (image_size * n_latent))

    mean = jnp.mean(norm)                                        # norm.mean().detach()
    denom = jnp.where(steps > 0.0, 1.0 - beta ** steps, 1.0)     # guard 0/0
    a = exp_sum_a / denom
    loss = jnp.where(steps > 0.0, jnp.mean((norm - a) ** 2), 0.0)
    new_exp_sum_a = exp_sum_a * beta + mean * (1.0 - beta)
    new_steps = steps + 1.0
    return loss, new_exp_sum_a, new_steps, norm


# --------------------------------------------------------------------------------- main
if __name__ == "__main__":
    key = jax.random.PRNGKey(0)
    B, C, H, W = 2, 4, 16, 16
    n_latent, w_dim = 8, 32
    D, CHW = n_latent * w_dim, C * H * W
    beta = 0.99

    k_w, k_g, k_y1, k_y2 = jax.random.split(key, 4)
    w = jax.random.normal(k_w, (B, n_latent, w_dim), jnp.float32)
    # Synthetic generator weight stored transposed (CHW, D), bf16 -- a one-time layout
    # decision at "weight init" so the kernel streams MXU-native (K, N) tiles.
    gen_weight_t = (jax.random.normal(k_g, (CHW, D), jnp.float32) * 0.05).astype(jnp.bfloat16)
    gw_t_f32 = gen_weight_t.astype(jnp.float32)
    x = (w.reshape(B, D) @ gw_t_f32.T).reshape(B, C, H, W)       # x = generator(w), NCHW

    steps = jnp.float32(0.0)
    exp_sum_a = jnp.float32(0.0)

    # step 1: steps == 0 branch (loss must be 0); step 2: steps > 0 branch.
    loss1, exp_sum_a, steps, norm1 = path_length_penalty(
        w, x, gen_weight_t, steps, exp_sum_a, beta, k_y1)
    loss2, exp_sum_a, steps, norm2 = path_length_penalty(
        w, x, gen_weight_t, steps, exp_sum_a, beta, k_y2)

    # Extra coverage: force small tiles (multi-K-step streaming + 2 parallel D tiles);
    # the per-sample norm must match the production-plan run.
    _, _, _, norm1_stream = path_length_penalty(
        w, x, gen_weight_t, jnp.float32(0.0), jnp.float32(0.0), beta, k_y1,
        tk_cap=128, nd_hint=2)

    jax.block_until_ready((loss1, loss2, exp_sum_a, steps, norm1, norm2, norm1_stream))

    # ---- pure-JAX f32 reference (mirrors torch.autograd.grad semantics) ----
    def ref_step(y_flat_f32, steps_v, esa_v):
        y_img = y_flat_f32.reshape(B, C, H, W)

        def output_fn(w_):
            x_ = (w_.reshape(B, D) @ gw_t_f32.T).reshape(B, C, H, W)
            return jnp.sum(x_ * y_img) / math.sqrt(H * W)

        with jax.default_matmul_precision("float32"):
            g = jax.grad(output_fn)(w)                           # (B, n_latent, w_dim)
        n = jnp.sqrt(jnp.mean(jnp.sum(g ** 2, axis=2), axis=1))
        if steps_v > 0:
            a = esa_v / (1.0 - beta ** steps_v)
            l = float(jnp.mean((n - a) ** 2))
        else:
            l = 0.0
        m = float(jnp.mean(n))
        return l, esa_v * beta + m * (1.0 - beta), steps_v + 1.0, n

    # The kernel streams y in bf16; the reference uses the identically-rounded noise.
    y1 = jax.random.normal(k_y1, (B, CHW), jnp.float32).astype(jnp.bfloat16).astype(jnp.float32)
    y2 = jax.random.normal(k_y2, (B, CHW), jnp.float32).astype(jnp.bfloat16).astype(jnp.float32)
    rl1, resa, rsteps, rn1 = ref_step(y1, 0.0, 0.0)
    rl2, resa, rsteps, rn2 = ref_step(y2, rsteps, resa)

    np.testing.assert_allclose(np.asarray(norm1), np.asarray(rn1), rtol=5e-3, atol=1e-5)
    np.testing.assert_allclose(np.asarray(norm2), np.asarray(rn2), rtol=5e-3, atol=1e-5)
    np.testing.assert_allclose(np.asarray(norm1_stream), np.asarray(norm1), rtol=1e-4, atol=1e-6)
    np.testing.assert_allclose(float(loss1), rl1, rtol=1e-2, atol=1e-6)
    np.testing.assert_allclose(float(loss2), rl2, rtol=1e-2, atol=1e-6)
    np.testing.assert_allclose(float(exp_sum_a), resa, rtol=5e-3, atol=1e-6)

    print("KERNEL_OK")
</pallas_src>

<mosaic_0001>
module attributes {stable_mosaic.version = 11 : i64} {
  func.func @grad_ssq_kernel(%arg0: i32, %arg1: i32, %arg2: memref<2x1024xbf16, #tpu.memory_space<vmem>>, %arg3: memref<1024x128xbf16, #tpu.memory_space<vmem>>, %arg4: memref<1x2x128xf32, #tpu.memory_space<vmem>>, %arg5: memref<2x128xf32, #tpu.memory_space<vmem>>) attributes {dimension_semantics = [#tpu.dimension_semantics<parallel>, #tpu.dimension_semantics<arbitrary>], iteration_bounds = array<i64: 2, 1>, scalar_prefetch = 0 : i64, scratch_operands = 1 : i64, tpu.core_type = #tpu.core_type<tc>, window_params = [{transform_indices = @transform_0, window_bounds = array<i64: 2, 1024>}, {transform_indices = @transform_1, window_bounds = array<i64: 1024, 128>}, {transform_indices = @transform_2, window_bounds = array<i64: 1, 2, 128>}]} {
    %c0_i32 = arith.constant 0 : i32
    %0 = arith.cmpi eq, %arg1, %c0_i32 : i32
    %1 = arith.extui %0 : i1 to i32
    %c0_i32_0 = arith.constant 0 : i32
    %2 = arith.cmpi ne, %1, %c0_i32_0 : i32
    scf.if %2 {
      %cst_10 = arith.constant 0.000000e+00 : f32
      %12 = vector.broadcast %cst_10 : f32 to vector<2x128xf32>
      %c0_11 = arith.constant 0 : index
      %c0_12 = arith.constant 0 : index
      %13 = vector.load %arg5[%c0_11, %c0_12] : memref<2x128xf32, #tpu.memory_space<vmem>>, vector<2x128xf32>
      tpu.vector_store %arg5[%c0_11, %c0_12], %12 {strides = array<i32>} : memref<2x128xf32, #tpu.memory_space<vmem>>, vector<2x128xf32>,
    } else {
    }
    %c0 = arith.constant 0 : index
    %c0_1 = arith.constant 0 : index
    %3 = vector.load %arg5[%c0, %c0_1] : memref<2x128xf32, #tpu.memory_space<vmem>>, vector<2x128xf32>
    %c0_2 = arith.constant 0 : index
    %c0_3 = arith.constant 0 : index
    %4 = vector.load %arg2[%c0_2, %c0_3] : memref<2x1024xbf16, #tpu.memory_space<vmem>>, vector<2x1024xbf16>
    %c0_4 = arith.constant 0 : index
    %c0_5 = arith.constant 0 : index
    %5 = vector.load %arg3[%c0_4, %c0_5] : memref<1024x128xbf16, #tpu.memory_space<vmem>>, vector<1024x128xbf16>
    %cst = arith.constant dense<0.000000e+00> : vector<2x128xf32>
    %6 = tpu.matmul %4, %5, %cst {dimension_numbers = #tpu.dot_dimension_numbers<[1], [0], [0], [1], [0, 0, 1, 1], [], []>} : vector<2x1024xbf16>, vector<1024x128xbf16>, vector<2x128xf32> -> vector<2x128xf32>
    %7 = arith.addf %3, %6 : vector<2x128xf32>
    %c0_6 = arith.constant 0 : index
    %c0_7 = arith.constant 0 : index
    %8 = vector.load %arg5[%c0_6, %c0_7] : memref<2x128xf32, #tpu.memory_space<vmem>>, vector<2x128xf32>
    tpu.vector_store %arg5[%c0_6, %c0_7], %7 {strides = array<i32>} : memref<2x128xf32, #tpu.memory_space<vmem>>, vector<2x128xf32>,
    %c0_i32_8 = arith.constant 0 : i32
    %9 = arith.cmpi eq, %arg1, %c0_i32_8 : i32
    %10 = arith.extui %9 : i1 to i32
    %c0_i32_9 = arith.constant 0 : i32
    %11 = arith.cmpi ne, %10, %c0_i32_9 : i32
    scf.if %11 {
      %c0_10 = arith.constant 0 : index
      %c0_11 = arith.constant 0 : index
      %12 = vector.load %arg5[%c0_10, %c0_11] : memref<2x128xf32, #tpu.memory_space<vmem>>, vector<2x128xf32>
      %13 = arith.mulf %12, %12 : vector<2x128xf32>
      %cst_12 = arith.constant dense<0.000000e+00> : vector<2xf32>
      %14 = vector.multi_reduction <add>, %13, %cst_12 [1] : vector<2x128xf32> to vector<2xf32>
      %15 = vector.shape_cast %14 : vector<2xf32> to vector<2x1xf32>
      %16 = vector.shape_cast %15 : vector<2x1xf32> to vector<1x2x1xf32>
      %17 = vector.shape_cast %16 : vector<1x2x1xf32> to vector<1x2x1xf32>
      %18 = vector.broadcast %17 : vector<1x2x1xf32> to vector<1x2x128xf32>
      %c0_13 = arith.constant 0 : index
      %c0_14 = arith.constant 0 : index
      %c0_15 = arith.constant 0 : index
      %19 = vector.load %arg4[%c0_13, %c0_14, %c0_15] : memref<1x2x128xf32, #tpu.memory_space<vmem>>, vector<1x2x128xf32>
      tpu.vector_store %arg4[%c0_13, %c0_14, %c0_15], %18 {strides = array<i32>} : memref<1x2x128xf32, #tpu.memory_space<vmem>>, vector<1x2x128xf32>,
    } else {
    }
    return
  }
  func.func @transform_0(%arg0: i32, %arg1: i32) -> (i32, i32) {
    %c0_i32 = arith.constant 0 : i32
    %c0_i32_0 = arith.constant 0 : i32
    return %c0_i32, %arg1 : i32, i32
  }
  func.func @transform_1(%arg0: i32, %arg1: i32) -> (i32, i32) {
    %c0_i32 = arith.constant 0 : i32
    return %arg1, %arg0 : i32, i32
  }
  func.func @transform_2(%arg0: i32, %arg1: i32) -> (i32, i32, i32) {
    %c0_i32 = arith.constant 0 : i32
    %c0_i32_0 = arith.constant 0 : i32
    %c0_i32_1 = arith.constant 0 : i32
    return %arg0, %c0_i32, %c0_i32_0 : i32, i32, i32
  }
}

</mosaic_0001>

<llo_original>
// kernel: tpu_custom_call.1
$region0: #{tpu_custom_call.1}
  #allocation0 [shape = 'u32[]', space=smem, size = 0x4, offset = 0x4, fixed_abs, tag = 'smem constant byte address 0x4 - core index']
  #allocation1 [shape = 'u32[144,128]{1,0:T(1,128)}', space=vmem, size = 0x12000, scoped, tag = 'internal scratch']
  #allocation2 [shape = 'f32[2,128]{1,0:T(2,128)}', space=vmem, size = 0x400, scoped, tag = 'scratch operand']
  %s0 = inlined_call_operand.hbm [shape: bf16[2,1024], index: 0, kind: input, shape index: {}]
  %s1 = inlined_call_operand.hbm [shape: bf16[1024,256], index: 1, kind: input, shape index: {}]
  %s2 = inlined_call_operand.hbm [shape: f32[2,2,128], index: 2, kind: output, shape index: {}]
  %s3 = sld [smem:[#allocation0]]
  $region57: #{tpu_custom_call.1} parent=0
    _
  %s5 = ssub.s32 1, %s3
  %s6 = scalar_select 0, %s5, %s3
  $region1: #{tpu_custom_call.1} parent=0
    #allocation3 [shape = 'u8[4096]{0}', space=vmem, size = 0x1000, scoped, tag = 'input window, operand 0, single buffered']
    #allocation4 [shape = 's32[2]{0}', space=sflag, size = 0x8, scoped, tag = 'scoped memory for tpu_custom_call.1']
    #allocation5 [shape = 's32[2]{0}', space=sflag, size = 0x8, scoped, tag = 'scoped memory for tpu_custom_call.1']
    #allocation6 [shape = 'u8[524288]{0}', space=vmem, size = 0x80000, scoped, tag = 'input window, operand 1']
    #allocation7 [shape = 's32[2]{0}', space=sflag, size = 0x8, scoped, tag = 'scoped memory for tpu_custom_call.1']
    #allocation8 [shape = 'u8[2048]{0}', space=vmem, size = 0x800, scoped, tag = 'output window, operand 0']
    %7 = vsyncpa [#allocation4], 0
    %8 = vsyncpa [#allocation7], 0
    %s9 = scalar_lea.sflag [#allocation7], 1
    %10 = vsyncpa %s9, 0
    %11 = vsyncpa [#allocation5], 0
    %s12 = scalar_lea.sflag [#allocation5], 1
    %13 = vsyncpa %s12, 0
    loop: start=0, step=1, limit=4
    $region2: #{tpu_custom_call.1} parent=1 // loop_pre_header
      _
    $region3: #{tpu_custom_call.1} parent=1 // loop_header
      %s15 = sphi 0, %s19
      %p16 = scmp.ge.s32.totalorder %s15, 4
      %s22 = sphi 0, %s34
      %s23 = sphi 0, %s30
      %s24 = sphi 0, %s22
      %s25 = sphi 0, %s23
      %s26 = sphi 0, %s24
      %s27 = sphi 0, %s25
      %s37 = sphi 0, %s39
      %s40 = sphi 0, %s37
      %s41 = sphi 0, %s40
      %s57 = sphi 0, %s41
      %s65 = sphi 0, %s67
      %s68 = sphi 0, %s65
      %s69 = sphi 0, %s68
      %s85 = sphi 0, %s69
      %s91 = sphi 0, %s93
      %s94 = sphi 0, %s91
      %s95 = sphi 0, %s94
      %s111 = sphi 0, %s95
    $region4: #{tpu_custom_call.1} parent=1 // loop_header_branch
      %18 = sbr.rel (%p16) target = $region8
    $region5: #{tpu_custom_call.1} parent=1 // loop_body
      %s20 = ssub.s32 %s15, 1
      %s21 = ssub.s32 %s15, 2
      %s28 = sadd.s32 1, %s23
      %p29 = scmp.ge.s32.totalorder %s28, 1
      %s30 = scalar_select %p29, 0, %s28
      %s31 = sadd.s32 1, %s22
      %s32 = scalar_select %p29, %s31, %s22
      %p33 = scmp.ge.s32.totalorder %s32, 2
      %s34 = scalar_select %p33, 0, %s32
      %s35 = ssub.s32 %s23, %s30
      %p36 = scmp.eq.s32.totalorder %s35, 0
      %s38 = sadd.s32 %s37, 1
      %s39 = scalar_select %p36, %s37, %s38
      %p42 = pneg %p36
      %p43 = scmp.eq.s32.totalorder %s15, 1
      %p44 = por %p42, %p43
      %p45 = scmp.ne.s32.totalorder %s37, %s40
      %p46 = scmp.eq.s32.totalorder %s15, 0
      %p47 = por %p45, %p46
      %p48 = scmp.ne.s32.totalorder %s37, %s40
      %p49 = scmp.eq.s32.totalorder %s20, 1
      %p50 = por %p48, %p49
      %p51 = scmp.ne.s32.totalorder %s40, %s41
      %p52 = scmp.eq.s32.totalorder %s20, 0
      %p53 = por %p51, %p52
      %p54 = scmp.ne.s32.totalorder %s40, %s41
      %p55 = scmp.eq.s32.totalorder %s21, 1
      %p56 = por %p54, %p55
      %p58 = scmp.ne.s32.totalorder %s41, %s57
      %p59 = scmp.eq.s32.totalorder %s21, 0
      %p60 = por %p58, %p59
      %s61 = ssub.s32 %s23, %s30
      %s62 = ssub.s32 %s22, %s34
      %s63 = sor.u32 %s61, %s62
      %p64 = scmp.eq.s32.totalorder %s63, 0
      %s66 = sadd.s32 %s65, 1
      %s67 = scalar_select %p64, %s65, %s66
      %p70 = pneg %p64
      %p71 = scmp.eq.s32.totalorder %s15, 1
      %p72 = por %p70, %p71
      %p73 = scmp.ne.s32.totalorder %s65, %s68
      %p74 = scmp.eq.s32.totalorder %s15, 0
      %p75 = por %p73, %p74
      %p76 = scmp.ne.s32.totalorder %s65, %s68
      %p77 = scmp.eq.s32.totalorder %s20, 1
      %p78 = por %p76, %p77
      %p79 = scmp.ne.s32.totalorder %s68, %s69
      %p80 = scmp.eq.s32.totalorder %s20, 0
      %p81 = por %p79, %p80
      %p82 = scmp.ne.s32.totalorder %s68, %s69
      %p83 = scmp.eq.s32.totalorder %s21, 1
      %p84 = por %p82, %p83
      %p86 = scmp.ne.s32.totalorder %s69, %s85
      %p87 = scmp.eq.s32.totalorder %s21, 0
      %p88 = por %p86, %p87
      %s89 = ssub.s32 %s22, %s34
      %p90 = scmp.eq.s32.totalorder %s89, 0
      %s92 = sadd.s32 %s91, 1
      %s93 = scalar_select %p90, %s91, %s92
      %p96 = pneg %p90
      %p97 = scmp.eq.s32.totalorder %s15, 1
      %p98 = por %p96, %p97
      %p99 = scmp.ne.s32.totalorder %s91, %s94
      %p100 = scmp.eq.s32.totalorder %s15, 0
      %p101 = por %p99, %p100
      %p102 = scmp.ne.s32.totalorder %s91, %s94
      %p103 = scmp.eq.s32.totalorder %s20, 1
      %p104 = por %p102, %p103
      %p105 = scmp.ne.s32.totalorder %s94, %s95
      %p106 = scmp.eq.s32.totalorder %s20, 0
      %p107 = por %p105, %p106
      %p108 = scmp.ne.s32.totalorder %s94, %s95
      %p109 = scmp.eq.s32.totalorder %s21, 1
      %p110 = por %p108, %p109
      %p112 = scmp.ne.s32.totalorder %s95, %s111
      %p113 = scmp.eq.s32.totalorder %s21, 0
      %p114 = por %p112, %p113
      %p115 = scmp.le.s32.totalorder 1, %s15
      %p116 = scmp.lt.s32.totalorder %s15, 3
      %p117 = pnand %p115, %p116
      %p118 = pneg %p117
      // Predicated region
      $region9: #{tpu_custom_call.1} parent=5 // pred_check
        _
      $region10: #{tpu_custom_call.1} parent=5 // pred_check_branch
        %120 = sbr.rel (%p117) target = $region12
      $region11: #{tpu_custom_call.1} parent=5 // pred_region
        %s121 = ssub.s32 %s15, 1
        // Predicated region
        $region13: #{tpu_custom_call.1} parent=11 // pred_check
          %p122 = pneg %p53
        $region14: #{tpu_custom_call.1} parent=11 // pred_check_branch
          %124 = sbr.rel (%p122) target = $region16
        $region15: #{tpu_custom_call.1} parent=11 // pred_region
          %s125 = smul.u32 8, %s25
          %s127 = ssub.s32 128, 128
          %128 = vsyncadd [#allocation4], %s127
          %s129 = smul.addr %s125, 16
          %s130 = scalar_lea.hbm %s0, %s129
          %s132 = sshll.u32 [#allocation3], 4
          %s133 = int_to_ptr.vmem [resolvable:$true] %s132
          %135 = dma.hbm_to_vmem [thread:$0]  %s130, 128, %s133, [#allocation4]
        $region16: #{tpu_custom_call.1} parent=11 // pred_fallthru
          _
      $region12: #{tpu_custom_call.1} parent=5 // pred_fallthru
        _
      %p136 = scmp.lt.s32.totalorder %s15, 2
      // Predicated region
      $region17: #{tpu_custom_call.1} parent=5 // pred_check
        %p137 = pneg %p136
      $region18: #{tpu_custom_call.1} parent=5 // pred_check_branch
        %139 = sbr.rel (%p137) target = $region20
      $region19: #{tpu_custom_call.1} parent=5 // pred_region
        // Predicated region
        $region21: #{tpu_custom_call.1} parent=19 // pred_check
          %p140 = pneg %p75
        $region22: #{tpu_custom_call.1} parent=19 // pred_check_branch
          %142 = sbr.rel (%p140) target = $region24
        $region23: #{tpu_custom_call.1} parent=19 // pred_region
          %s143 = sand.u32 %s65, 1
          %s144 = scalar_lea.sflag [#allocation7], %s143
          %s145 = sand.u32 %s65, 1
          %s146 = smul.addr %s145, 512
          %s147 = scalar_lea.vmem [#allocation6], %s146
          %s148 = smul.u32 128, %s23
          %s150 = ssub.s32 8192, 8192
          %151 = vsyncadd %s144, %s150
          %s152 = smul.addr %s148, 2
          %s153 = sadd.s32 %s22, %s152
          %s154 = smul.addr %s153, 64
          %s155 = scalar_lea.hbm %s1, %s154
          %s156 = sshll.u32 %s147, 4
          %s157 = int_to_ptr.vmem [resolvable:$true] %s156
          %162 = dma.hbm_to_vmem [thread:$0]  %s155, 8192, %s157, %s144, 128, 64, 4
        $region24: #{tpu_custom_call.1} parent=19 // pred_fallthru
          _
      $region20: #{tpu_custom_call.1} parent=5 // pred_fallthru
        _
      %p163 = scmp.le.s32.totalorder 1, %s15
      %p164 = scmp.lt.s32.totalorder %s15, 3
      %p165 = pnand %p163, %p164
      %p166 = pneg %p165
      // Predicated region
      $region25: #{tpu_custom_call.1} parent=5 // pred_check
        _
      $region26: #{tpu_custom_call.1} parent=5 // pred_check_branch
        %168 = sbr.rel (%p165) target = $region28
      $region27: #{tpu_custom_call.1} parent=5 // pred_region
        %s169 = ssub.s32 %s15, 1
        // Predicated region
        $region29: #{tpu_custom_call.1} parent=27 // pred_check
          %p170 = pneg %p53
        $region30: #{tpu_custom_call.1} parent=27 // pred_check_branch
          %172 = sbr.rel (%p170) target = $region32
        $region31: #{tpu_custom_call.1} parent=27 // pred_region
          %173 = dma.done [#allocation4], 128
        $region32: #{tpu_custom_call.1} parent=27 // pred_fallthru
          _
        %s174 = sand.u32 %s68, 1
        %s175 = scalar_lea.sflag [#allocation7], %s174
        %s176 = sand.u32 %s68, 1
        %s177 = smul.addr %s176, 512
        %s178 = scalar_lea.vmem [#allocation6], %s177
        // Predicated region
        $region33: #{tpu_custom_call.1} parent=27 // pred_check
          %p179 = pneg %p81
        $region34: #{tpu_custom_call.1} parent=27 // pred_check_branch
          %181 = sbr.rel (%p179) target = $region36
        $region35: #{tpu_custom_call.1} parent=27 // pred_region
          %182 = dma.done %s175, 8192
        $region36: #{tpu_custom_call.1} parent=27 // pred_fallthru
          _
        %p183 = pneg %p53
        %p184 = pneg %p50
        %s185 = sand.u32 %s68, 1
        %s186 = scalar_lea.sflag [#allocation7], %s185
        %s187 = sand.u32 %s68, 1
        %s188 = smul.addr %s187, 512
        %s189 = scalar_lea.vmem [#allocation6], %s188
        %p190 = pneg %p81
        %p191 = pneg %p78
        %p192 = pneg %p107
        %p193 = pneg %p104
        %s194 = sand.u32 %s94, 1
        %s195 = scalar_lea.sflag [#allocation5], %s194
        %s196 = sand.u32 %s94, 1
        %s197 = smul.addr %s196, 2
        %s198 = scalar_lea.vmem [#allocation8], %s197
        %s199 = smul.u32 8, %s25
        %s200 = smul.u32 128, %s25
        %p202 = scmp.eq.s32.totalorder %s25, 0
        // Predicated region
        $region37: #{tpu_custom_call.1} parent=27 // pred_check
          %p203 = pneg %p202
        $region38: #{tpu_custom_call.1} parent=27 // pred_check_branch
          %205 = sbr.rel (%p203) target = $region40
        $region39: #{tpu_custom_call.1} parent=27 // pred_region
          %206 = vst [vmem:[#allocation2] sm:$0x3] 0.0
        $region40: #{tpu_custom_call.1} parent=27 // pred_fallthru
          _
        %v207 = vld [vmem:[#allocation2] sm:$0x3]
        %v208 = vld [vmem:[#allocation3] sm:$0xff]
        %v209 = vld [vmem:[%s178] sm:$0xf]
        %v210 = vld [vmem:[%s178 + $0x4] sm:$0xf]
        %v211 = vld [vmem:[%s178 + $0x8] sm:$0xf]
        %v212 = vld [vmem:[%s178 + $0xc] sm:$0xf]
        %v213 = vld [vmem:[%s178 + $0x10] sm:$0xf]
        %v214 = vld [vmem:[%s178 + $0x14] sm:$0xf]
        %v215 = vld [vmem:[%s178 + $0x18] sm:$0xf]
        %v216 = vld [vmem:[%s178 + $0x1c] sm:$0xf]
        %v217 = vld [vmem:[%s178 + $0x20] sm:$0xf]
        %v218 = vld [vmem:[%s178 + $0x24] sm:$0xf]
        %v219 = vld [vmem:[%s178 + $0x28] sm:$0xf]
        %v220 = vld [vmem:[%s178 + $0x2c] sm:$0xf]
        %v221 = vld [vmem:[%s178 + $0x30] sm:$0xf]
        %v222 = vld [vmem:[%s178 + $0x34] sm:$0xf]
        %v223 = vld [vmem:[%s178 + $0x38] sm:$0xf]
        %v224 = vld [vmem:[%s178 + $0x3c] sm:$0xf]
        %v225 = vld [vmem:[%s178 + $0x40] sm:$0xf]
        %v226 = vld [vmem:[%s178 + $0x44] sm:$0xf]
        %v227 = vld [vmem:[%s178 + $0x48] sm:$0xf]
        %v228 = vld [vmem:[%s178 + $0x4c] sm:$0xf]
        %v229 = vld [vmem:[%s178 + $0x50] sm:$0xf]
        %v230 = vld [vmem:[%s178 + $0x54] sm:$0xf]
        %v231 = vld [vmem:[%s178 + $0x58] sm:$0xf]
        %v232 = vld [vmem:[%s178 + $0x5c] sm:$0xf]
        %v233 = vld [vmem:[%s178 + $0x60] sm:$0xf]
        %v234 = vld [vmem:[%s178 + $0x64] sm:$0xf]
        %v235 = vld [vmem:[%s178 + $0x68] sm:$0xf]
        %v236 = vld [vmem:[%s178 + $0x6c] sm:$0xf]
        %v237 = vld [vmem:[%s178 + $0x70] sm:$0xf]
        %v238 = vld [vmem:[%s178 + $0x74] sm:$0xf]
        %v239 = vld [vmem:[%s178 + $0x78] sm:$0xf]
        %v240 = vld [vmem:[%s178 + $0x7c] sm:$0xf]
        %v241 = vld [vmem:[%s178 + $0x80] sm:$0xf]
        %v242 = vld [vmem:[%s178 + $0x84] sm:$0xf]
        %v243 = vld [vmem:[%s178 + $0x88] sm:$0xf]
        %v244 = vld [vmem:[%s178 + $0x8c] sm:$0xf]
        %v245 = vld [vmem:[%s178 + $0x90] sm:$0xf]
        %v246 = vld [vmem:[%s178 + $0x94] sm:$0xf]
        %v247 = vld [vmem:[%s178 + $0x98] sm:$0xf]
        %v248 = vld [vmem:[%s178 + $0x9c] sm:$0xf]
        %v249 = vld [vmem:[%s178 + $0xa0] sm:$0xf]
        %v250 = vld [vmem:[%s178 + $0xa4] sm:$0xf]
        %v251 = vld [vmem:[%s178 + $0xa8] sm:$0xf]
        %v252 = vld [vmem:[%s178 + $0xac] sm:$0xf]
        %v253 = vld [vmem:[%s178 + $0xb0] sm:$0xf]
        %v254 = vld [vmem:[%s178 + $0xb4] sm:$0xf]
        %v255 = vld [vmem:[%s178 + $0xb8] sm:$0xf]
        %v256 = vld [vmem:[%s178 + $0xbc] sm:$0xf]
        %v257 = vld [vmem:[%s178 + $0xc0] sm:$0xf]
        %v258 = vld [vmem:[%s178 + $0xc4] sm:$0xf]
        %v259 = vld [vmem:[%s178 + $0xc8] sm:$0xf]
        %v260 = vld [vmem:[%s178 + $0xcc] sm:$0xf]
        %v261 = vld [vmem:[%s178 + $0xd0] sm:$0xf]
        %v262 = vld [vmem:[%s178 + $0xd4] sm:$0xf]
        %v263 = vld [vmem:[%s178 + $0xd8] sm:$0xf]
        %v264 = vld [vmem:[%s178 + $0xdc] sm:$0xf]
        %v265 = vld [vmem:[%s178 + $0xe0] sm:$0xf]
        %v266 = vld [vmem:[%s178 + $0xe4] sm:$0xf]
        %v267 = vld [vmem:[%s178 + $0xe8] sm:$0xf]
        %v268 = vld [vmem:[%s178 + $0xec] sm:$0xf]
        %v269 = vld [vmem:[%s178 + $0xf0] sm:$0xf]
        %v270 = vld [vmem:[%s178 + $0xf4] sm:$0xf]
        %v271 = vld [vmem:[%s178 + $0xf8] sm:$0xf]
        %v272 = vld [vmem:[%s178 + $0xfc] sm:$0xf]
        %v273 = vld [vmem:[%s178 + $0x100] sm:$0xf]
        %v274 = vld [vmem:[%s178 + $0x104] sm:$0xf]
        %v275 = vld [vmem:[%s178 + $0x108] sm:$0xf]
        %v276 = vld [vmem:[%s178 + $0x10c] sm:$0xf]
        %v277 = vld [vmem:[%s178 + $0x110] sm:$0xf]
        %v278 = vld [vmem:[%s178 + $0x114] sm:$0xf]
        %v279 = vld [vmem:[%s178 + $0x118] sm:$0xf]
        %v280 = vld [vmem:[%s178 + $0x11c] sm:$0xf]
        %v281 = vld [vmem:[%s178 + $0x120] sm:$0xf]
        %v282 = vld [vmem:[%s178 + $0x124] sm:$0xf]
        %v283 = vld [vmem:[%s178 + $0x128] sm:$0xf]
        %v284 = vld [vmem:[%s178 + $0x12c] sm:$0xf]
        %v285 = vld [vmem:[%s178 + $0x130] sm:$0xf]
        %v286 = vld [vmem:[%s178 + $0x134] sm:$0xf]
        %v287 = vld [vmem:[%s178 + $0x138] sm:$0xf]
        %v288 = vld [vmem:[%s178 + $0x13c] sm:$0xf]
        %v289 = vld [vmem:[%s178 + $0x140] sm:$0xf]
        %v290 = vld [vmem:[%s178 + $0x144] sm:$0xf]
        %v291 = vld [vmem:[%s178 + $0x148] sm:$0xf]
        %v292 = vld [vmem:[%s178 + $0x14c] sm:$0xf]
        %v293 = vld [vmem:[%s178 + $0x150] sm:$0xf]
        %v294 = vld [vmem:[%s178 + $0x154] sm:$0xf]
        %v295 = vld [vmem:[%s178 + $0x158] sm:$0xf]
        %v296 = vld [vmem:[%s178 + $0x15c] sm:$0xf]
        %v297 = vld [vmem:[%s178 + $0x160] sm:$0xf]
        %v298 = vld [vmem:[%s178 + $0x164] sm:$0xf]
        %v299 = vld [vmem:[%s178 + $0x168] sm:$0xf]
        %v300 = vld [vmem:[%s178 + $0x16c] sm:$0xf]
        %v301 = vld [vmem:[%s178 + $0x170] sm:$0xf]
        %v302 = vld [vmem:[%s178 + $0x174] sm:$0xf]
        %v303 = vld [vmem:[%s178 + $0x178] sm:$0xf]
        %v304 = vld [vmem:[%s178 + $0x17c] sm:$0xf]
        %v305 = vld [vmem:[%s178 + $0x180] sm:$0xf]
        %v306 = vld [vmem:[%s178 + $0x184] sm:$0xf]
        %v307 = vld [vmem:[%s178 + $0x188] sm:$0xf]
        %v308 = vld [vmem:[%s178 + $0x18c] sm:$0xf]
        %v309 = vld [vmem:[%s178 + $0x190] sm:$0xf]
        %v310 = vld [vmem:[%s178 + $0x194] sm:$0xf]
        %v311 = vld [vmem:[%s178 + $0x198] sm:$0xf]
        %v312 = vld [vmem:[%s178 + $0x19c] sm:$0xf]
        %v313 = vld [vmem:[%s178 + $0x1a0] sm:$0xf]
        %v314 = vld [vmem:[%s178 + $0x1a4] sm:$0xf]
        %v315 = vld [vmem:[%s178 + $0x1a8] sm:$0xf]
        %v316 = vld [vmem:[%s178 + $0x1ac] sm:$0xf]
        %v317 = vld [vmem:[%s178 + $0x1b0] sm:$0xf]
        %v318 = vld [vmem:[%s178 + $0x1b4] sm:$0xf]
        %v319 = vld [vmem:[%s178 + $0x1b8] sm:$0xf]
        %v320 = vld [vmem:[%s178 + $0x1bc] sm:$0xf]
        %v321 = vld [vmem:[%s178 + $0x1c0] sm:$0xf]
        %v322 = vld [vmem:[%s178 + $0x1c4] sm:$0xf]
        %v323 = vld [vmem:[%s178 + $0x1c8] sm:$0xf]
        %v324 = vld [vmem:[%s178 + $0x1cc] sm:$0xf]
        %v325 = vld [vmem:[%s178 + $0x1d0] sm:$0xf]
        %v326 = vld [vmem:[%s178 + $0x1d4] sm:$0xf]
        %v327 = vld [vmem:[%s178 + $0x1d8] sm:$0xf]
        %v328 = vld [vmem:[%s178 + $0x1dc] sm:$0xf]
        %v329 = vld [vmem:[%s178 + $0x1e0] sm:$0xf]
        %v330 = vld [vmem:[%s178 + $0x1e4] sm:$0xf]
        %v331 = vld [vmem:[%s178 + $0x1e8] sm:$0xf]
        %v332 = vld [vmem:[%s178 + $0x1ec] sm:$0xf]
        %v333 = vld [vmem:[%s178 + $0x1f0] sm:$0xf]
        %v334 = vld [vmem:[%s178 + $0x1f4] sm:$0xf]
        %v335 = vld [vmem:[%s178 + $0x1f8] sm:$0xf]
        %v336 = vld [vmem:[%s178 + $0x1fc] sm:$0xf]
        %v338 = vcombine.high %v208, %v208
        %v340 = vunpack.c.l.s4 1966171168
        %v341 = vunpack.c.0.s8 %v340
        %v342 = vlaneseq
        %v343 = vshrl.u32 %v342, 7
        %v344 = vsub.s32 %v341, %v343
        %v345 = vrot.slane %v208, %v344
        %v347 = vunpack.c.l.s4 1966171168
        %v348 = vunpack.c.0.s8 %v347
        %v349 = vlaneseq
        %v350 = vshrl.u32 %v349, 7
        %v351 = vsub.s32 %v348, %v350
        %v352 = vrot.slane %v338, %v351
        %v353 = vcombine.high %v345, %v345
        %v354 = vcombine.high %v352, %v352
        %v356 = vunpack.c.l.s4 1966171168
        %v357 = vunpack.c.0.s8 %v356
        %v358 = vlaneseq
        %v359 = vshrl.u32 %v358, 7
        %v360 = vsub.s32 %v357, %v359
        %v361 = vrot.slane %v345, %v360
        %v363 = vunpack.c.l.s4 1966171168
        %v364 = vunpack.c.0.s8 %v363
        %v365 = vlaneseq
        %v366 = vshrl.u32 %v365, 7
        %v367 = vsub.s32 %v364, %v366
        %v368 = vrot.slane %v352, %v367
        %v370 = vunpack.c.l.s4 1966171168
        %v371 = vunpack.c.0.s8 %v370
        %v372 = vlaneseq
        %v373 = vshrl.u32 %v372, 7
        %v374 = vsub.s32 %v371, %v373
        %v375 = vrot.slane %v353, %v374
        %v377 = vunpack.c.l.s4 1966171168
        %v378 = vunpack.c.0.s8 %v377
        %v379 = vlaneseq
        %v380 = vshrl.u32 %v379, 7
        %v381 = vsub.s32 %v378, %v380
        %v382 = vrot.slane %v354, %v381
        %v383 = vcombine.high %v361, %v361
        %v384 = vcombine.high %v368, %v368
        %v385 = vcombine.high %v375, %v375
        %v386 = vcombine.high %v382, %v382
        %v523 = vunpack.c.l.b16 %v209
        %v524 = vunpack.c.l.b16 %v210
        %v525 = vunpack.c.l.b16 %v211
        %v526 = vunpack.c.l.b16 %v212
        %v527 = vunpack.c.l.b16 %v213
        %v528 = vunpack.c.l.b16 %v214
        %v529 = vunpack.c.l.b16 %v215
        %v530 = vunpack.c.l.b16 %v216
        %v531 = vunpack.c.l.b16 %v217
        %v532 = vunpack.c.l.b16 %v218
        %v533 = vunpack.c.l.b16 %v219
        %v534 = vunpack.c.l.b16 %v220
        %v535 = vunpack.c.l.b16 %v221
        %v536 = vunpack.c.l.b16 %v222
        %v537 = vunpack.c.l.b16 %v223
        %v538 = vunpack.c.l.b16 %v224
        %v539 = vunpack.c.l.b16 %v225
        %v540 = vunpack.c.l.b16 %v226
        %v541 = vunpack.c.l.b16 %v227
        %v542 = vunpack.c.l.b16 %v228
        %v543 = vunpack.c.l.b16 %v229
        %v544 = vunpack.c.l.b16 %v230
        %v545 = vunpack.c.l.b16 %v231
        %v546 = vunpack.c.l.b16 %v232
        %v547 = vunpack.c.l.b16 %v233
        %v548 = vunpack.c.l.b16 %v234
        %v549 = vunpack.c.l.b16 %v235
        %v550 = vunpack.c.l.b16 %v236
        %v551 = vunpack.c.l.b16 %v237
        %v552 = vunpack.c.l.b16 %v238
        %v553 = vunpack.c.l.b16 %v239
        %v554 = vunpack.c.l.b16 %v240
        %v555 = vunpack.c.l.b16 %v241
        %v556 = vunpack.c.l.b16 %v242
        %v557 = vunpack.c.l.b16 %v243
        %v558 = vunpack.c.l.b16 %v244
        %v559 = vunpack.c.l.b16 %v245
        %v560 = vunpack.c.l.b16 %v246
        %v561 = vunpack.c.l.b16 %v247
        %v562 = vunpack.c.l.b16 %v248
        %v563 = vunpack.c.l.b16 %v249
        %v564 = vunpack.c.l.b16 %v250
        %v565 = vunpack.c.l.b16 %v251
        %v566 = vunpack.c.l.b16 %v252
        %v567 = vunpack.c.l.b16 %v253
        %v568 = vunpack.c.l.b16 %v254
        %v569 = vunpack.c.l.b16 %v255
        %v570 = vunpack.c.l.b16 %v256
        %v571 = vunpack.c.l.b16 %v257
        %v572 = vunpack.c.l.b16 %v258
        %v573 = vunpack.c.l.b16 %v259
        %v574 = vunpack.c.l.b16 %v260
        %v575 = vunpack.c.l.b16 %v261
        %v576 = vunpack.c.l.b16 %v262
        %v577 = vunpack.c.l.b16 %v263
        %v578 = vunpack.c.l.b16 %v264
        %v579 = vunpack.c.l.b16 %v265
        %v580 = vunpack.c.l.b16 %v266
        %v581 = vunpack.c.l.b16 %v267
        %v582 = vunpack.c.l.b16 %v268
        %v583 = vunpack.c.l.b16 %v269
        %v584 = vunpack.c.l.b16 %v270
        %v585 = vunpack.c.l.b16 %v271
        %v586 = vunpack.c.l.b16 %v272
        %v587 = vunpack.c.l.b16 %v273
        %v588 = vunpack.c.l.b16 %v274
        %v589 = vunpack.c.l.b16 %v275
        %v590 = vunpack.c.l.b16 %v276
        %v591 = vunpack.c.l.b16 %v277
        %v592 = vunpack.c.l.b16 %v278
        %v593 = vunpack.c.l.b16 %v279
        %v594 = vunpack.c.l.b16 %v280
        %v595 = vunpack.c.l.b16 %v281
        %v596 = vunpack.c.l.b16 %v282
        %v597 = vunpack.c.l.b16 %v283
        %v598 = vunpack.c.l.b16 %v284
        %v599 = vunpack.c.l.b16 %v285
        %v600 = vunpack.c.l.b16 %v286
        %v601 = vunpack.c.l.b16 %v287
        %v602 = vunpack.c.l.b16 %v288
        %v603 = vunpack.c.l.b16 %v289
        %v604 = vunpack.c.l.b16 %v290
        %v605 = vunpack.c.l.b16 %v291
        %v606 = vunpack.c.l.b16 %v292
        %v607 = vunpack.c.l.b16 %v293
        %v608 = vunpack.c.l.b16 %v294
        %v609 = vunpack.c.l.b16 %v295
        %v610 = vunpack.c.l.b16 %v296
        %v611 = vunpack.c.l.b16 %v297
        %v612 = vunpack.c.l.b16 %v298
        %v613 = vunpack.c.l.b16 %v299
        %v614 = vunpack.c.l.b16 %v300
        %v615 = vunpack.c.l.b16 %v301
        %v616 = vunpack.c.l.b16 %v302
        %v617 = vunpack.c.l.b16 %v303
        %v618 = vunpack.c.l.b16 %v304
        %v619 = vunpack.c.l.b16 %v305
        %v620 = vunpack.c.l.b16 %v306
        %v621 = vunpack.c.l.b16 %v307
        %v622 = vunpack.c.l.b16 %v308
        %v623 = vunpack.c.l.b16 %v309
        %v624 = vunpack.c.l.b16 %v310
        %v625 = vunpack.c.l.b16 %v311
        %v626 = vunpack.c.l.b16 %v312
        %v627 = vunpack.c.l.b16 %v313
        %v628 = vunpack.c.l.b16 %v314
        %v629 = vunpack.c.l.b16 %v315
        %v630 = vunpack.c.l.b16 %v316
        %v631 = vunpack.c.l.b16 %v317
        %v632 = vunpack.c.l.b16 %v318
        %v633 = vunpack.c.l.b16 %v319
        %v634 = vunpack.c.l.b16 %v320
        %v635 = vunpack.c.l.b16 %v321
        %v636 = vunpack.c.l.b16 %v322
        %v637 = vunpack.c.l.b16 %v323
        %v638 = vunpack.c.l.b16 %v324
        %v639 = vunpack.c.l.b16 %v325
        %v640 = vunpack.c.l.b16 %v326
        %v641 = vunpack.c.l.b16 %v327
        %v642 = vunpack.c.l.b16 %v328
        %v643 = vunpack.c.l.b16 %v329
        %v644 = vunpack.c.l.b16 %v330
        %v645 = vunpack.c.l.b16 %v331
        %v646 = vunpack.c.l.b16 %v332
        %v647 = vunpack.c.l.b16 %v333
        %v648 = vunpack.c.l.b16 %v334
        %v649 = vunpack.c.l.b16 %v335
        %v650 = vunpack.c.l.b16 %v336
        %v651 = vpack.c.b16 %v524, %v523
        %v652 = vpack.c.b16 %v526, %v525
        %v653 = vpack.c.b16 %v528, %v527
        %v654 = vpack.c.b16 %v530, %v529
        %v655 = vpack.c.b16 %v532, %v531
        %v656 = vpack.c.b16 %v534, %v533
        %v657 = vpack.c.b16 %v536, %v535
        %v658 = vpack.c.b16 %v538, %v537
        %v659 = vpack.c.b16 %v540, %v539
        %v660 = vpack.c.b16 %v542, %v541
        %v661 = vpack.c.b16 %v544, %v543
        %v662 = vpack.c.b16 %v546, %v545
        %v663 = vpack.c.b16 %v548, %v547
        %v664 = vpack.c.b16 %v550, %v549
        %v665 = vpack.c.b16 %v552, %v551
        %v666 = vpack.c.b16 %v554, %v553
        %v667 = vpack.c.b16 %v556, %v555
        %v668 = vpack.c.b16 %v558, %v557
        %v669 = vpack.c.b16 %v560, %v559
        %v670 = vpack.c.b16 %v562, %v561
        %v671 = vpack.c.b16 %v564, %v563
        %v672 = vpack.c.b16 %v566, %v565
        %v673 = vpack.c.b16 %v568, %v567
        %v674 = vpack.c.b16 %v570, %v569
        %v675 = vpack.c.b16 %v572, %v571
        %v676 = vpack.c.b16 %v574, %v573
        %v677 = vpack.c.b16 %v576, %v575
        %v678 = vpack.c.b16 %v578, %v577
        %v679 = vpack.c.b16 %v580, %v579
        %v680 = vpack.c.b16 %v582, %v581
        %v681 = vpack.c.b16 %v584, %v583
        %v682 = vpack.c.b16 %v586, %v585
        %v683 = vpack.c.b16 %v588, %v587
        %v684 = vpack.c.b16 %v590, %v589
        %v685 = vpack.c.b16 %v592, %v591
        %v686 = vpack.c.b16 %v594, %v593
        %v687 = vpack.c.b16 %v596, %v595
        %v688 = vpack.c.b16 %v598, %v597
        %v689 = vpack.c.b16 %v600, %v599
        %v690 = vpack.c.b16 %v602, %v601
        %v691 = vpack.c.b16 %v604, %v603
        %v692 = vpack.c.b16 %v606, %v605
        %v693 = vpack.c.b16 %v608, %v607
        %v694 = vpack.c.b16 %v610, %v609
        %v695 = vpack.c.b16 %v612, %v611
        %v696 = vpack.c.b16 %v614, %v613
        %v697 = vpack.c.b16 %v616, %v615
        %v698 = vpack.c.b16 %v618, %v617
        %v699 = vpack.c.b16 %v620, %v619
        %v700 = vpack.c.b16 %v622, %v621
        %v701 = vpack.c.b16 %v624, %v623
        %v702 = vpack.c.b16 %v626, %v625
        %v703 = vpack.c.b16 %v628, %v627
        %v704 = vpack.c.b16 %v630, %v629
        %v705 = vpack.c.b16 %v632, %v631
        %v706 = vpack.c.b16 %v634, %v633
        %v707 = vpack.c.b16 %v636, %v635
        %v708 = vpack.c.b16 %v638, %v637
        %v709 = vpack.c.b16 %v640, %v639
        %v710 = vpack.c.b16 %v642, %v641
        %v711 = vpack.c.b16 %v644, %v643
        %v712 = vpack.c.b16 %v646, %v645
        %v713 = vpack.c.b16 %v648, %v647
        %v714 = vpack.c.b16 %v650, %v649
        %779 = vmatprep.subr.bf16.mxu0 0
        %780 = vmatpush1.bf16.msra.mxu0 %v651
        %781 = vmatprep.subr.bf16.mxu0 0
        %782 = vmatpush1.bf16.msra.mxu0 %v652
        %783 = vmatprep.subr.bf16.mxu0 0
        %784 = vmatpush1.bf16.msra.mxu0 %v653
        %785 = vmatprep.subr.bf16.mxu0 0
        %786 = vmatpush1.bf16.msra.mxu0 %v654
        %787 = vmatprep.subr.bf16.mxu0 0
        %788 = vmatpush1.bf16.msra.mxu0 %v655
        %789 = vmatprep.subr.bf16.mxu0 0
        %790 = vmatpush1.bf16.msra.mxu0 %v656
        %791 = vmatprep.subr.bf16.mxu0 0
        %792 = vmatpush1.bf16.msra.mxu0 %v657
        %793 = vmatprep.subr.bf16.mxu0 0
        %794 = vmatpush1.bf16.msra.mxu0 %v658
        %795 = vmatprep.subr.bf16.mxu0 0
        %796 = vmatpush1.bf16.msra.mxu0 %v659
        %797 = vmatprep.subr.bf16.mxu0 0
        %798 = vmatpush1.bf16.msra.mxu0 %v660
        %799 = vmatprep.subr.bf16.mxu0 0
        %800 = vmatpush1.bf16.msra.mxu0 %v661
        %801 = vmatprep.subr.bf16.mxu0 0
        %802 = vmatpush1.bf16.msra.mxu0 %v662
        %803 = vmatprep.subr.bf16.mxu0 0
        %804 = vmatpush1.bf16.msra.mxu0 %v663
        %805 = vmatprep.subr.bf16.mxu0 0
        %806 = vmatpush1.bf16.msra.mxu0 %v664
        %807 = vmatprep.subr.bf16.mxu0 0
        %808 = vmatpush1.bf16.msra.mxu0 %v665
        %809 = vmatprep.subr.bf16.mxu0 0
        %810 = vmatpush1.bf16.msra.mxu0 %v666
        %811 = vmatprep.mubr.bf16.mxu0 %v375
        %812 = vmatmul.mubr.bf16.gmra.mrb[0].mxu0 %v361
        %v813 = vpop.f32.mrb[0].mxu0
        %v814 = vadd.f32 0.0, %v813
        %v815 = vpop.f32.mrb[0].mxu0
        %v816 = vpop.f32.mrb[0].mxu0
        %v817 = vpop.f32.mrb[0].mxu0
        %818 = vdwg.mxu0
        %819 = vmatprep.subr.bf16.mxu0 0
        %820 = vmatpush1.bf16.msra.mxu0 %v667
        %821 = vmatprep.subr.bf16.mxu0 0
        %822 = vmatpush1.bf16.msra.mxu0 %v668
        %823 = vmatprep.subr.bf16.mxu0 0
        %824 = vmatpush1.bf16.msra.mxu0 %v669
        %825 = vmatprep.subr.bf16.mxu0 0
        %826 = vmatpush1.bf16.msra.mxu0 %v670
        %827 = vmatprep.subr.bf16.mxu0 0
        %828 = vmatpush1.bf16.msra.mxu0 %v671
        %829 = vmatprep.subr.bf16.mxu0 0
        %830 = vmatpush1.bf16.msra.mxu0 %v672
        %831 = vmatprep.subr.bf16.mxu0 0
        %832 = vmatpush1.bf16.msra.mxu0 %v673
        %833 = vmatprep.subr.bf16.mxu0 0
        %834 = vmatpush1.bf16.msra.mxu0 %v674
        %835 = vmatprep.subr.bf16.mxu0 0
        %836 = vmatpush1.bf16.msra.mxu0 %v675
        %837 = vmatprep.subr.bf16.mxu0 0
        %838 = vmatpush1.bf16.msra.mxu0 %v676
        %839 = vmatprep.subr.bf16.mxu0 0
        %840 = vmatpush1.bf16.msra.mxu0 %v677
        %841 = vmatprep.subr.bf16.mxu0 0
        %842 = vmatpush1.bf16.msra.mxu0 %v678
        %843 = vmatprep.subr.bf16.mxu0 0
        %844 = vmatpush1.bf16.msra.mxu0 %v679
        %845 = vmatprep.subr.bf16.mxu0 0
        %846 = vmatpush1.bf16.msra.mxu0 %v680
        %847 = vmatprep.subr.bf16.mxu0 0
        %848 = vmatpush1.bf16.msra.mxu0 %v681
        %849 = vmatprep.subr.bf16.mxu0 0
        %850 = vmatpush1.bf16.msra.mxu0 %v682
        %851 = vmatprep.mubr.bf16.mxu0 %v385
        %852 = vmatmul.mubr.bf16.gmra.mrb[0].mxu0 %v383
        %v853 = vpop.f32.mrb[0].mxu0
        %v854 = vadd.f32 %v814, %v853
        %v855 = vpop.f32.mrb[0].mxu0
        %v856 = vpop.f32.mrb[0].mxu0
        %v857 = vpop.f32.mrb[0].mxu0
        %858 = vdwg.mxu0
        %859 = vmatprep.subr.bf16.mxu0 0
        %860 = vmatpush1.bf16.msra.mxu0 %v683
        %861 = vmatprep.subr.bf16.mxu0 0
        %862 = vmatpush1.bf16.msra.mxu0 %v684
        %863 = vmatprep.subr.bf16.mxu0 0
        %864 = vmatpush1.bf16.msra.mxu0 %v685
        %865 = vmatprep.subr.bf16.mxu0 0
        %866 = vmatpush1.bf16.msra.mxu0 %v686
        %867 = vmatprep.subr.bf16.mxu0 0
        %868 = vmatpush1.bf16.msra.mxu0 %v687
        %869 = vmatprep.subr.bf16.mxu0 0
        %870 = vmatpush1.bf16.msra.mxu0 %v688
        %871 = vmatprep.subr.bf16.mxu0 0
        %872 = vmatpush1.bf16.msra.mxu0 %v689
        %873 = vmatprep.subr.bf16.mxu0 0
        %874 = vmatpush1.bf16.msra.mxu0 %v690
        %875 = vmatprep.subr.bf16.mxu0 0
        %876 = vmatpush1.bf16.msra.mxu0 %v691
        %877 = vmatprep.subr.bf16.mxu0 0
        %878 = vmatpush1.bf16.msra.mxu0 %v692
        %879 = vmatprep.subr.bf16.mxu0 0
        %880 = vmatpush1.bf16.msra.mxu0 %v693
        %881 = vmatprep.subr.bf16.mxu0 0
        %882 = vmatpush1.bf16.msra.mxu0 %v694
        %883 = vmatprep.subr.bf16.mxu0 0
        %884 = vmatpush1.bf16.msra.mxu0 %v695
        %885 = vmatprep.subr.bf16.mxu0 0
        %886 = vmatpush1.bf16.msra.mxu0 %v696
        %887 = vmatprep.subr.bf16.mxu0 0
        %888 = vmatpush1.bf16.msra.mxu0 %v697
        %889 = vmatprep.subr.bf16.mxu0 0
        %890 = vmatpush1.bf16.msra.mxu0 %v698
        %891 = vmatprep.mubr.bf16.mxu0 %v382
        %892 = vmatmul.mubr.bf16.gmra.mrb[0].mxu0 %v368
        %v893 = vpop.f32.mrb[0].mxu0
        %v894 = vadd.f32 %v854, %v893
        %v895 = vpop.f32.mrb[0].mxu0
        %v896 = vpop.f32.mrb[0].mxu0
        %v897 = vpop.f32.mrb[0].mxu0
        %898 = vdwg.mxu0
        %899 = vmatprep.subr.bf16.mxu0 0
        %900 = vmatpush1.bf16.msra.mxu0 %v699
        %901 = vmatprep.subr.bf16.mxu0 0
        %902 = vmatpush1.bf16.msra.mxu0 %v700
        %903 = vmatprep.subr.bf16.mxu0 0
        %904 = vmatpush1.bf16.msra.mxu0 %v701
        %905 = vmatprep.subr.bf16.mxu0 0
        %906 = vmatpush1.bf16.msra.mxu0 %v702
        %907 = vmatprep.subr.bf16.mxu0 0
        %908 = vmatpush1.bf16.msra.mxu0 %v703
        %909 = vmatprep.subr.bf16.mxu0 0
        %910 = vmatpush1.bf16.msra.mxu0 %v704
        %911 = vmatprep.subr.bf16.mxu0 0
        %912 = vmatpush1.bf16.msra.mxu0 %v705
        %913 = vmatprep.subr.bf16.mxu0 0
        %914 = vmatpush1.bf16.msra.mxu0 %v706
        %915 = vmatprep.subr.bf16.mxu0 0
        %916 = vmatpush1.bf16.msra.mxu0 %v707
        %917 = vmatprep.subr.bf16.mxu0 0
        %918 = vmatpush1.bf16.msra.mxu0 %v708
        %919 = vmatprep.subr.bf16.mxu0 0
        %920 = vmatpush1.bf16.msra.mxu0 %v709
        %921 = vmatprep.subr.bf16.mxu0 0
        %922 = vmatpush1.bf16.msra.mxu0 %v710
        %923 = vmatprep.subr.bf16.mxu0 0
        %924 = vmatpush1.bf16.msra.mxu0 %v711
        %925 = vmatprep.subr.bf16.mxu0 0
        %926 = vmatpush1.bf16.msra.mxu0 %v712
        %927 = vmatprep.subr.bf16.mxu0 0
        %928 = vmatpush1.bf16.msra.mxu0 %v713
        %929 = vmatprep.subr.bf16.mxu0 0
        %930 = vmatpush1.bf16.msra.mxu0 %v714
        %931 = vmatprep.mubr.bf16.mxu0 %v386
        %932 = vmatmul.mubr.bf16.gmra.mrb[0].mxu0 %v384
        %v933 = vpop.f32.mrb[0].mxu0
        %v934 = vadd.f32 %v894, %v933
        %v935 = vpop.f32.mrb[0].mxu0
        %v936 = vpop.f32.mrb[0].mxu0
        %v937 = vpop.f32.mrb[0].mxu0
        %938 = vdwg.mxu0
        %v939 = vadd.f32 %v207, %v934
        %940 = vst [vmem:[#allocation2] sm:$0x3] %v939
        // Predicated region
        $region41: #{tpu_custom_call.1} parent=27 // pred_check
          %p941 = pneg %p202
        $region42: #{tpu_custom_call.1} parent=27 // pred_check_branch
          %943 = sbr.rel (%p941) target = $region44
        $region43: #{tpu_custom_call.1} parent=27 // pred_region
          %v944 = vld [vmem:[#allocation2] sm:$0x3]
          %v945 = vmul.f32 %v944, %v944
          %vm946 = vcmask 1041408
          %v947 = vsel %vm946, %v945, 0.0
          %948 = vadd.xlane.f32.xlu0 %v947
          %v949 = vpop.xlane.xlu0 %948
          %950 = vst [vmem:[%s198] sm:$0x3] %v949
        $region44: #{tpu_custom_call.1} parent=27 // pred_fallthru
          _
        %s951 = sand.u32 %s94, 1
        %s952 = scalar_lea.sflag [#allocation5], %s951
        %s953 = sand.u32 %s94, 1
        %s954 = smul.addr %s953, 2
        %s955 = scalar_lea.vmem [#allocation8], %s954
        // Predicated region
        $region45: #{tpu_custom_call.1} parent=27 // pred_check
          %p956 = pneg %p104
        $region46: #{tpu_custom_call.1} parent=27 // pred_check_branch
          %958 = sbr.rel (%p956) target = $region48
        $region47: #{tpu_custom_call.1} parent=27 // pred_region
          %s960 = ssub.s32 32, 32
          %961 = vsyncadd %s952, %s960
          %s962 = smul.addr %s24, 32
          %s963 = scalar_lea.hbm %s2, %s962
          %s965 = sshll.u32 %s955, 4
          %s966 = int_to_ptr.vmem [resolvable:$true] %s965
          %968 = dma.vmem_to_hbm [thread:$0]  %s966, 32, %s963, %s952
        $region48: #{tpu_custom_call.1} parent=27 // pred_fallthru
          _
      $region28: #{tpu_custom_call.1} parent=5 // pred_fallthru
        _
      %p969 = scmp.le.s32.totalorder 2, %s15
      // Predicated region
      $region49: #{tpu_custom_call.1} parent=5 // pred_check
        %p970 = pneg %p969
      $region50: #{tpu_custom_call.1} parent=5 // pred_check_branch
        %972 = sbr.rel (%p970) target = $region52
      $region51: #{tpu_custom_call.1} parent=5 // pred_region
        %s973 = ssub.s32 %s15, 2
        // Predicated region
        $region53: #{tpu_custom_call.1} parent=51 // pred_check
          %p974 = pneg %p110
        $region54: #{tpu_custom_call.1} parent=51 // pred_check_branch
          %976 = sbr.rel (%p974) target = $region56
        $region55: #{tpu_custom_call.1} parent=51 // pred_region
          %s977 = sand.u32 %s95, 1
          %s978 = scalar_lea.sflag [#allocation5], %s977
          %s979 = sand.u32 %s95, 1
          %s980 = smul.addr %s979, 2
          %s981 = scalar_lea.vmem [#allocation8], %s980
          %982 = dma.done %s978, 32
        $region56: #{tpu_custom_call.1} parent=51 // pred_fallthru
          _
      $region52: #{tpu_custom_call.1} parent=5 // pred_fallthru
        _
    $region6: #{tpu_custom_call.1} parent=1 // loop_footer
      %s19 = sadd.s32 1, %s15
    $region7: #{tpu_custom_call.1} parent=1 // loop_footer_branch
      %14 = sbr.rel target = $region3
    $region8: #{tpu_custom_call.1} parent=1 // loop_exit
      _
    %983 = vsyncpa [#allocation4], 1
    %s984 = scalar_lea.sflag [#allocation4], 1
    %985 = vsyncpa %s984, 1
    %986 = vsyncpa [#allocation7], 1
    %s987 = scalar_lea.sflag [#allocation7], 1
    %988 = vsyncpa %s987, 1
    %989 = vsyncpa [#allocation5], 1
    %s990 = scalar_lea.sflag [#allocation5], 1
    %991 = vsyncpa %s990, 1

</llo_original>
